<compile_context>
chip_gen: v5e
topology: v5e:2x2
jax: 0.10.0
libtpu: 0.0.40
codegen_flags: <defaults>
</compile_context>

<pallas_src>
import math

import jax
import jax.numpy as jnp
from jax import lax
from jax.experimental import pallas as pl
from jax.experimental.pallas import tpu as pltpu

_BF16 = jnp.bfloat16
_F32 = jnp.float32


# ----------------------------------------------------------------------------
# helpers
# ----------------------------------------------------------------------------
def _bts(shape, dtype):
    return math.prod(shape) * jnp.dtype(dtype).itemsize


def _vmem_limit(per_call_bytes):
    # Generous headroom, floored at the default scoped limits, capped below
    # v7x's 64 MiB physical VMEM per TensorCore.
    return int(min(max(2 * per_call_bytes + (8 << 20), 32 << 20), 60 << 20))


def _full_spec(shape):
    nd = len(shape)
    return pl.BlockSpec(shape, lambda i, _nd=nd: (0,) * _nd)


def _pick_row_tile(n, max_tile, per_row_bytes, budget_bytes):
    """Largest row tile <= max_tile (multiple of 128) whose double-buffered
    streamed blocks fit the VMEM budget.  If n <= max_tile, use the full n."""
    if n <= max_tile:
        return n
    t = max_tile
    while t > 128 and 2 * t * per_row_bytes > budget_bytes:
        t //= 2
    return t


# ----------------------------------------------------------------------------
# kernels
# ----------------------------------------------------------------------------
def _fused_kernel(x_ref, xt_ref, adj_ref, w1_ref, w23_ref, wa1_ref, wa23_ref,
                  eps_u_ref, eps_a_ref,
                  mu_logvar_ref, mu_logvar_a_ref, pred_adj_ref, pred_x_ref):
    """Whole forward in one kernel (small/medium graphs): z stays in VMEM."""
    adj = adj_ref[...]

    # GCN node branch: keep adj @ (x @ W) associativity (narrow contraction).
    xw1 = jnp.dot(x_ref[...], w1_ref[...], preferred_element_type=_F32)
    h1 = jnp.maximum(
        jnp.dot(adj, xw1.astype(_BF16), preferred_element_type=_F32), 0.0)
    h1w = jnp.dot(h1.astype(_BF16), w23_ref[...], preferred_element_type=_F32)
    mu_logvar = jnp.dot(adj, h1w.astype(_BF16), preferred_element_type=_F32)

    # Attribute branch: x.T was pre-transposed in the wrapper (plain NN matmul).
    h_a1 = jnp.tanh(jnp.dot(xt_ref[...], wa1_ref[...],
                            preferred_element_type=_F32))
    mu_logvar_a = jnp.dot(h_a1.astype(_BF16), wa23_ref[...],
                          preferred_element_type=_F32)

    mu_logvar_ref[...] = mu_logvar
    mu_logvar_a_ref[...] = mu_logvar_a

    # Reparameterize (training mode): z = eps * exp(logvar) + mu, in f32.
    h2 = eps_u_ref.shape[1]
    z_u = (eps_u_ref[...] * jnp.exp(mu_logvar[:, h2:])
           + mu_logvar[:, :h2]).astype(_BF16)
    z_a = (eps_a_ref[...] * jnp.exp(mu_logvar_a[:, h2:])
           + mu_logvar_a[:, :h2]).astype(_BF16)

    # InnerDecoder (identity act): f32 accumulate, cast only on the final store.
    nt = (((1,), (1,)), ((), ()))
    pred_adj_ref[...] = lax.dot_general(
        z_u, z_u, nt, preferred_element_type=_F32).astype(pred_adj_ref.dtype)
    pred_x_ref[...] = lax.dot_general(
        z_u, z_a, nt, preferred_element_type=_F32).astype(pred_x_ref.dtype)


def _prep_kernel(x_ref, xt_ref, w1_ref, wa1_ref, wa23_ref, eps_a_ref,
                 xw1_ref, mu_logvar_a_ref, z_at_ref):
    """Split path, stage 0: xw1 = x @ W1 and the full (tiny) attribute branch."""
    xw1_ref[...] = jnp.dot(x_ref[...], w1_ref[...],
                           preferred_element_type=_F32).astype(_BF16)

    h_a1 = jnp.tanh(jnp.dot(xt_ref[...], wa1_ref[...],
                            preferred_element_type=_F32))
    mu_logvar_a = jnp.dot(h_a1.astype(_BF16), wa23_ref[...],
                          preferred_element_type=_F32)
    mu_logvar_a_ref[...] = mu_logvar_a

    h2 = eps_a_ref.shape[1]
    z_a = eps_a_ref[...] * jnp.exp(mu_logvar_a[:, h2:]) + mu_logvar_a[:, :h2]
    z_at_ref[...] = z_a.T.astype(_BF16)          # lane-dense (H2, F)


def _gcn_pass1_kernel(adj_ref, xw1_ref, w23_ref, h1w_ref):
    """Split path, stage 1 (row-tiled): h1w_blk = relu(adj_blk @ xw1) @ W23."""
    h1 = jnp.maximum(
        jnp.dot(adj_ref[...], xw1_ref[...], preferred_element_type=_F32), 0.0)
    h1w_ref[...] = jnp.dot(h1.astype(_BF16), w23_ref[...],
                           preferred_element_type=_F32).astype(_BF16)


def _gcn_pass2_kernel(adj_ref, h1w_ref, eps_u_ref,
                      mu_logvar_ref, z_u_ref, z_ut_ref):
    """Split path, stage 2 (row-tiled): mu||logvar = adj_blk @ h1w; reparam."""
    mu_logvar = jnp.dot(adj_ref[...], h1w_ref[...], preferred_element_type=_F32)
    mu_logvar_ref[...] = mu_logvar

    h2 = eps_u_ref.shape[1]
    z_u = eps_u_ref[...] * jnp.exp(mu_logvar[:, h2:]) + mu_logvar[:, :h2]
    z_u_ref[...] = z_u.astype(_BF16)             # (tile, H2)  -> decoder LHS
    z_ut_ref[...] = z_u.T.astype(_BF16)          # (H2, tile)  -> lane-dense RHS


def _decoder_kernel(z_u_ref, z_ut_ref, z_at_ref, pred_adj_ref, pred_x_ref):
    """Split path, stage 3 (row-tiled): two plain NN matmuls, lane-dense stores."""
    z_u = z_u_ref[...]
    pred_adj_ref[...] = jnp.dot(
        z_u, z_ut_ref[...], preferred_element_type=_F32).astype(pred_adj_ref.dtype)
    pred_x_ref[...] = jnp.dot(
        z_u, z_at_ref[...], preferred_element_type=_F32).astype(pred_x_ref.dtype)


# ----------------------------------------------------------------------------
# forward wrapper
# ----------------------------------------------------------------------------
def gcn_vaece_forward(x, adj, params, eps_u, eps_a, *,
                      mode="auto",
                      encoder_row_tile=256,
                      decoder_row_tile=512,
                      pred_dtype=jnp.bfloat16):
    """Forward pass of GCNModelVAECE.  Returns
    (pred_adj, pred_x, mu, logvar, mu_a, logvar_a)."""
    if mode not in ("auto", "fused", "split"):
        raise ValueError(f"unknown mode: {mode}")

    N, F = x.shape
    H1 = params["w1"].shape[1]
    H2 = params["w2"].shape[1]

    # MXU-native bf16 operands (f32 accumulation happens inside the kernels);
    # sibling weights fused along the output dim; x pre-transposed once in XLA.
    x_bf = x.astype(_BF16)
    xt_bf = jnp.transpose(x).astype(_BF16)
    adj_bf = adj.astype(_BF16)
    w1 = params["w1"].astype(_BF16)
    w23 = jnp.concatenate([params["w2"], params["w3"]], axis=1).astype(_BF16)
    wa1 = params["wa1"].astype(_BF16)
    wa23 = jnp.concatenate([params["wa2"], params["wa3"]], axis=1).astype(_BF16)
    eps_u = eps_u.astype(_F32)
    eps_a = eps_a.astype(_F32)

    # Rough VMEM footprint of the single fused kernel (adj + pred dominate).
    fused_bytes = (2 * (_bts((N, N), _BF16) + 2 * _bts((N, F), _BF16)
                        + _bts((N, H2), _F32) + _bts((F, H2), _F32))
                   + 2 * (_bts((N, 2 * H2), _F32) + _bts((F, 2 * H2), _F32)
                          + _bts((N, N), pred_dtype) + _bts((N, F), pred_dtype))
                   + 8 * _bts((N, max(H1, 2 * H2)), _F32))
    if mode == "auto":
        mode = "fused" if fused_bytes < (40 << 20) else "split"

    if mode == "fused":
        enc_in = (x_bf, xt_bf, adj_bf, w1, w23, wa1, wa23, eps_u, eps_a)
        out_shapes = (
            jax.ShapeDtypeStruct((N, 2 * H2), _F32),      # mu || logvar
            jax.ShapeDtypeStruct((F, 2 * H2), _F32),      # mu_a || logvar_a
            jax.ShapeDtypeStruct((N, N), pred_dtype),     # pred_adj
            jax.ShapeDtypeStruct((N, F), pred_dtype),     # pred_x
        )
        flops = 2 * (N * F * H1 + N * N * H1 + N * H1 * 2 * H2 + N * N * 2 * H2
                     + F * N * H1 + F * H1 * 2 * H2 + N * N * H2 + N * F * H2)
        transc = F * H1 + (N + F) * H2
        bytes_acc = (sum(_bts(a.shape, a.dtype) for a in enc_in)
                     + sum(_bts(s.shape, s.dtype) for s in out_shapes))

        mu_logvar, mu_logvar_a, pred_adj, pred_x = pl.pallas_call(
            _fused_kernel,
            out_shape=out_shapes,
            grid=(1,),
            in_specs=[_full_spec(a.shape) for a in enc_in],
            out_specs=tuple(_full_spec(s.shape) for s in out_shapes),
            compiler_params=pltpu.CompilerParams(
                dimension_semantics=("arbitrary",),
                vmem_limit_bytes=_vmem_limit(fused_bytes)),
            cost_estimate=pl.CostEstimate(flops=int(flops),
                                          transcendentals=int(transc),
                                          bytes_accessed=int(bytes_acc)),
        )(*enc_in)

    else:  # "split": row-tiled adjacency passes + row-tiled decoder
        budget = 40 << 20

        # ---- stage 0: prep (tiny: (N,H1) and (F,·) matrices) ----------------
        prep_in = (x_bf, xt_bf, w1, wa1, wa23, eps_a)
        prep_out = (
            jax.ShapeDtypeStruct((N, H1), _BF16),          # xw1
            jax.ShapeDtypeStruct((F, 2 * H2), _F32),       # mu_a || logvar_a
            jax.ShapeDtypeStruct((H2, F), _BF16),          # z_a^T (lane-dense)
        )
        prep_bytes = (2 * sum(_bts(a.shape, a.dtype) for a in prep_in)
                      + 2 * sum(_bts(s.shape, s.dtype) for s in prep_out))
        xw1, mu_logvar_a, z_at = pl.pallas_call(
            _prep_kernel,
            out_shape=prep_out,
            grid=(1,),
            in_specs=[_full_spec(a.shape) for a in prep_in],
            out_specs=tuple(_full_spec(s.shape) for s in prep_out),
            compiler_params=pltpu.CompilerParams(
                dimension_semantics=("arbitrary",),
                vmem_limit_bytes=_vmem_limit(prep_bytes)),
        )(*prep_in)

        # ---- stage 1: h1w = relu(adj_blk @ xw1) @ W23, row-tiled ------------
        tm_e = _pick_row_tile(N, encoder_row_tile,
                              N * 2 + (2 * H2) * 6 + H2 * 8, budget)
        nb_e = pl.cdiv(N, tm_e)
        p1_bytes = (2 * (tm_e * N * 2 + tm_e * 2 * H2 * 2)
                    + _bts((N, H1), _BF16) + _bts((H1, 2 * H2), _BF16))
        h1w = pl.pallas_call(
            _gcn_pass1_kernel,
            out_shape=jax.ShapeDtypeStruct((N, 2 * H2), _BF16),
            grid=(nb_e,),
            in_specs=[pl.BlockSpec((tm_e, N), lambda i: (i, 0)),
                      pl.BlockSpec((N, H1), lambda i: (0, 0)),
                      pl.BlockSpec((H1, 2 * H2), lambda i: (0, 0))],
            out_specs=pl.BlockSpec((tm_e, 2 * H2), lambda i: (i, 0)),
            compiler_params=pltpu.CompilerParams(
                dimension_semantics=("parallel",),
                vmem_limit_bytes=_vmem_limit(p1_bytes)),
            cost_estimate=pl.CostEstimate(
                flops=int(2 * (N * N * H1 + N * H1 * 2 * H2)),
                transcendentals=0,
                bytes_accessed=int(_bts((N, N), _BF16)
                                   + nb_e * _bts((N, H1), _BF16)
                                   + _bts((N, 2 * H2), _BF16))),
        )(adj_bf, xw1, w23)

        # ---- stage 2: mu||logvar = adj_blk @ h1w; reparameterize ------------
        p2_bytes = (2 * (tm_e * N * 2 + tm_e * 2 * H2 * 4 + tm_e * H2 * 6
                         + H2 * tm_e * 2)
                    + _bts((N, 2 * H2), _BF16))
        mu_logvar, z_u, z_ut = pl.pallas_call(
            _gcn_pass2_kernel,
            out_shape=(jax.ShapeDtypeStruct((N, 2 * H2), _F32),
                       jax.ShapeDtypeStruct((N, H2), _BF16),
                       jax.ShapeDtypeStruct((H2, N), _BF16)),
            grid=(nb_e,),
            in_specs=[pl.BlockSpec((tm_e, N), lambda i: (i, 0)),
                      pl.BlockSpec((N, 2 * H2), lambda i: (0, 0)),
                      pl.BlockSpec((tm_e, H2), lambda i: (i, 0))],
            out_specs=(pl.BlockSpec((tm_e, 2 * H2), lambda i: (i, 0)),
                       pl.BlockSpec((tm_e, H2), lambda i: (i, 0)),
                       pl.BlockSpec((H2, tm_e), lambda i: (0, i))),
            compiler_params=pltpu.CompilerParams(
                dimension_semantics=("parallel",),
                vmem_limit_bytes=_vmem_limit(p2_bytes)),
            cost_estimate=pl.CostEstimate(
                flops=int(2 * N * N * 2 * H2),
                transcendentals=int(N * H2),
                bytes_accessed=int(_bts((N, N), _BF16)
                                   + nb_e * _bts((N, 2 * H2), _BF16)
                                   + _bts((N, 2 * H2), _F32)
                                   + 2 * _bts((N, H2), _BF16))),
        )(adj_bf, h1w, eps_u)

        # ---- stage 3: decoder, two lane-dense outputs, row-tiled ------------
        pred_row_bytes = (N + F) * jnp.dtype(pred_dtype).itemsize + H2 * 2
        tm_d = _pick_row_tile(N, decoder_row_tile, pred_row_bytes, budget)
        nb_d = pl.cdiv(N, tm_d)
        dec_bytes = (2 * (tm_d * H2 * 2
                          + tm_d * (N + F) * jnp.dtype(pred_dtype).itemsize)
                     + _bts((H2, N), _BF16) + _bts((H2, F), _BF16))
        pred_adj, pred_x = pl.pallas_call(
            _decoder_kernel,
            out_shape=(jax.ShapeDtypeStruct((N, N), pred_dtype),
                       jax.ShapeDtypeStruct((N, F), pred_dtype)),
            grid=(nb_d,),
            in_specs=[pl.BlockSpec((tm_d, H2), lambda i: (i, 0)),
                      pl.BlockSpec((H2, N), lambda i: (0, 0)),
                      pl.BlockSpec((H2, F), lambda i: (0, 0))],
            out_specs=(pl.BlockSpec((tm_d, N), lambda i: (i, 0)),
                       pl.BlockSpec((tm_d, F), lambda i: (i, 0))),
            compiler_params=pltpu.CompilerParams(
                dimension_semantics=("parallel",),
                vmem_limit_bytes=_vmem_limit(dec_bytes)),
            cost_estimate=pl.CostEstimate(
                flops=int(2 * N * (N + F) * H2),
                transcendentals=0,
                bytes_accessed=int(_bts((N, H2), _BF16)
                                   + nb_d * (_bts((H2, N), _BF16)
                                             + _bts((H2, F), _BF16))
                                   + _bts((N, N), pred_dtype)
                                   + _bts((N, F), pred_dtype))),
        )(z_u, z_ut, z_at)

    # mu/logvar splits are tiny (N x H2 / F x H2); the big decoder outputs are
    # already separate lane-dense arrays (no wrapper slicing of the slab).
    mu, logvar = mu_logvar[:, :H2], mu_logvar[:, H2:]
    mu_a, logvar_a = mu_logvar_a[:, :H2], mu_logvar_a[:, H2:]
    return pred_adj, pred_x, mu, logvar, mu_a, logvar_a


def _xavier_uniform(key, shape):
    fan_in, fan_out = shape
    limit = (6.0 / (fan_in + fan_out)) ** 0.5
    return jax.random.uniform(key, shape, jnp.float32, -limit, limit)


if __name__ == "__main__":
    # Small deterministic problem consistent with the module:
    #   n_nodes N=128, input_feat_dim F=64, hidden_dim1=32, hidden_dim2=16.
    N, F, H1, H2 = 128, 64, 32, 16

    key = jax.random.PRNGKey(0)
    keys = jax.random.split(key, 10)

    # Features and a symmetric row-normalized dense adjacency.
    x = jax.random.uniform(keys[0], (N, F), jnp.float32)
    a_raw = (jax.random.uniform(keys[1], (N, N), jnp.float32) > 0.9).astype(jnp.float32)
    adj = a_raw + a_raw.T + jnp.eye(N, dtype=jnp.float32)
    deg = jnp.clip(adj.sum(axis=1, keepdims=True), 1.0, None)
    adj = adj / deg

    params = {
        "w1":  _xavier_uniform(keys[2], (F, H1)),    # GraphConvolutionSparse
        "w2":  _xavier_uniform(keys[3], (H1, H2)),   # gc2
        "w3":  _xavier_uniform(keys[4], (H1, H2)),   # gc3
        "wa1": _xavier_uniform(keys[5], (N, H1)),    # linear_a1 (acts on x.T)
        "wa2": _xavier_uniform(keys[6], (H1, H2)),   # linear_a2
        "wa3": _xavier_uniform(keys[7], (H1, H2)),   # linear_a3
    }

    # Deterministic reparameterization noise (eps ~ randn_like in PyTorch).
    eps_u = jax.random.normal(keys[8], (N, H2), jnp.float32)
    eps_a = jax.random.normal(keys[9], (F, H2), jnp.float32)

    # Exercise both code paths (fused single-kernel and row-tiled split).
    fused = gcn_vaece_forward(x, adj, params, eps_u, eps_a, mode="fused")
    split = gcn_vaece_forward(x, adj, params, eps_u, eps_a, mode="split")
    fused, split = jax.block_until_ready((fused, split))

    names = ("pred_adj", "pred_x", "mu", "logvar", "mu_a", "logvar_a")
    shapes = ((N, N), (N, F), (N, H2), (N, H2), (F, H2), (F, H2))
    for name, shp, a_f, a_s in zip(names, shapes, fused, split):
        assert a_f.shape == shp and a_s.shape == shp, name
        af32 = a_f.astype(jnp.float32)
        as32 = a_s.astype(jnp.float32)
        assert bool(jnp.isfinite(af32).all()), name
        assert bool(jnp.isfinite(as32).all()), name
        # The two paths must agree up to bf16 rounding of z / pred.
        assert bool(jnp.allclose(af32, as32, rtol=5e-2, atol=5e-2)), name

    print("KERNEL_OK")
</pallas_src>

<mosaic_0001>
module attributes {stable_mosaic.version = 11 : i64} {
  func.func @_fused_kernel(%arg0: i32, %arg1: memref<128x64xbf16, #tpu.memory_space<vmem>>, %arg2: memref<64x128xbf16, #tpu.memory_space<vmem>>, %arg3: memref<128x128xbf16, #tpu.memory_space<vmem>>, %arg4: memref<64x32xbf16, #tpu.memory_space<vmem>>, %arg5: memref<32x32xbf16, #tpu.memory_space<vmem>>, %arg6: memref<128x32xbf16, #tpu.memory_space<vmem>>, %arg7: memref<32x32xbf16, #tpu.memory_space<vmem>>, %arg8: memref<128x16xf32, #tpu.memory_space<vmem>>, %arg9: memref<64x16xf32, #tpu.memory_space<vmem>>, %arg10: memref<128x32xf32, #tpu.memory_space<vmem>>, %arg11: memref<64x32xf32, #tpu.memory_space<vmem>>, %arg12: memref<128x128xbf16, #tpu.memory_space<vmem>>, %arg13: memref<128x64xbf16, #tpu.memory_space<vmem>>) attributes {dimension_semantics = [#tpu.dimension_semantics<arbitrary>], iteration_bounds = array<i64: 1>, scalar_prefetch = 0 : i64, scratch_operands = 0 : i64, tpu.core_type = #tpu.core_type<tc>, window_params = [{pipeline_mode = #tpu.pipeline_mode<synchronous>, transform_indices = @transform_0, window_bounds = array<i64: 128, 64>}, {pipeline_mode = #tpu.pipeline_mode<synchronous>, transform_indices = @transform_1, window_bounds = array<i64: 64, 128>}, {pipeline_mode = #tpu.pipeline_mode<synchronous>, transform_indices = @transform_2, window_bounds = array<i64: 128, 128>}, {pipeline_mode = #tpu.pipeline_mode<synchronous>, transform_indices = @transform_3, window_bounds = array<i64: 64, 32>}, {pipeline_mode = #tpu.pipeline_mode<synchronous>, transform_indices = @transform_4, window_bounds = array<i64: 32, 32>}, {pipeline_mode = #tpu.pipeline_mode<synchronous>, transform_indices = @transform_5, window_bounds = array<i64: 128, 32>}, {pipeline_mode = #tpu.pipeline_mode<synchronous>, transform_indices = @transform_6, window_bounds = array<i64: 32, 32>}, {pipeline_mode = #tpu.pipeline_mode<synchronous>, transform_indices = @transform_7, window_bounds = array<i64: 128, 16>}, {pipeline_mode = #tpu.pipeline_mode<synchronous>, transform_indices = @transform_8, window_bounds = array<i64: 64, 16>}, {pipeline_mode = #tpu.pipeline_mode<synchronous>, transform_indices = @transform_9, window_bounds = array<i64: 128, 32>}, {pipeline_mode = #tpu.pipeline_mode<synchronous>, transform_indices = @transform_10, window_bounds = array<i64: 64, 32>}, {pipeline_mode = #tpu.pipeline_mode<synchronous>, transform_indices = @transform_11, window_bounds = array<i64: 128, 128>}, {pipeline_mode = #tpu.pipeline_mode<synchronous>, transform_indices = @transform_12, window_bounds = array<i64: 128, 64>}]} {
    %c0 = arith.constant 0 : index
    %c0_0 = arith.constant 0 : index
    %0 = vector.load %arg3[%c0, %c0_0] : memref<128x128xbf16, #tpu.memory_space<vmem>>, vector<128x128xbf16>
    %c0_1 = arith.constant 0 : index
    %c0_2 = arith.constant 0 : index
    %1 = vector.load %arg1[%c0_1, %c0_2] : memref<128x64xbf16, #tpu.memory_space<vmem>>, vector<128x64xbf16>
    %c0_3 = arith.constant 0 : index
    %c0_4 = arith.constant 0 : index
    %2 = vector.load %arg4[%c0_3, %c0_4] : memref<64x32xbf16, #tpu.memory_space<vmem>>, vector<64x32xbf16>
    %cst = arith.constant dense<0.000000e+00> : vector<128x32xf32>
    %3 = tpu.matmul %1, %2, %cst {dimension_numbers = #tpu.dot_dimension_numbers<[1], [0], [0], [1], [0, 0, 1, 1], [], []>} : vector<128x64xbf16>, vector<64x32xbf16>, vector<128x32xf32> -> vector<128x32xf32>
    %4 = arith.truncf %3 : vector<128x32xf32> to vector<128x32xbf16>
    %cst_5 = arith.constant dense<0.000000e+00> : vector<128x32xf32>
    %5 = tpu.matmul %0, %4, %cst_5 {dimension_numbers = #tpu.dot_dimension_numbers<[1], [0], [0], [1], [0, 0, 1, 1], [], []>} : vector<128x128xbf16>, vector<128x32xbf16>, vector<128x32xf32> -> vector<128x32xf32>
    %cst_6 = arith.constant 0.000000e+00 : f32
    %6 = vector.broadcast %cst_6 : f32 to vector<128x32xf32>
    %7 = arith.maximumf %5, %6 : vector<128x32xf32>
    %8 = arith.truncf %7 : vector<128x32xf32> to vector<128x32xbf16>
    %c0_7 = arith.constant 0 : index
    %c0_8 = arith.constant 0 : index
    %9 = vector.load %arg5[%c0_7, %c0_8] : memref<32x32xbf16, #tpu.memory_space<vmem>>, vector<32x32xbf16>
    %cst_9 = arith.constant dense<0.000000e+00> : vector<128x32xf32>
    %10 = tpu.matmul %8, %9, %cst_9 {dimension_numbers = #tpu.dot_dimension_numbers<[1], [0], [0], [1], [0, 0, 1, 1], [], []>} : vector<128x32xbf16>, vector<32x32xbf16>, vector<128x32xf32> -> vector<128x32xf32>
    %11 = arith.truncf %10 : vector<128x32xf32> to vector<128x32xbf16>
    %cst_10 = arith.constant dense<0.000000e+00> : vector<128x32xf32>
    %12 = tpu.matmul %0, %11, %cst_10 {dimension_numbers = #tpu.dot_dimension_numbers<[1], [0], [0], [1], [0, 0, 1, 1], [], []>} : vector<128x128xbf16>, vector<128x32xbf16>, vector<128x32xf32> -> vector<128x32xf32>
    %c0_11 = arith.constant 0 : index
    %c0_12 = arith.constant 0 : index
    %13 = vector.load %arg2[%c0_11, %c0_12] : memref<64x128xbf16, #tpu.memory_space<vmem>>, vector<64x128xbf16>
    %c0_13 = arith.constant 0 : index
    %c0_14 = arith.constant 0 : index
    %14 = vector.load %arg6[%c0_13, %c0_14] : memref<128x32xbf16, #tpu.memory_space<vmem>>, vector<128x32xbf16>
    %cst_15 = arith.constant dense<0.000000e+00> : vector<64x32xf32>
    %15 = tpu.matmul %13, %14, %cst_15 {dimension_numbers = #tpu.dot_dimension_numbers<[1], [0], [0], [1], [0, 0, 1, 1], [], []>} : vector<64x128xbf16>, vector<128x32xbf16>, vector<64x32xf32> -> vector<64x32xf32>
    %16 = math.tanh %15 : vector<64x32xf32>
    %17 = arith.truncf %16 : vector<64x32xf32> to vector<64x32xbf16>
    %c0_16 = arith.constant 0 : index
    %c0_17 = arith.constant 0 : index
    %18 = vector.load %arg7[%c0_16, %c0_17] : memref<32x32xbf16, #tpu.memory_space<vmem>>, vector<32x32xbf16>
    %cst_18 = arith.constant dense<0.000000e+00> : vector<64x32xf32>
    %19 = tpu.matmul %17, %18, %cst_18 {dimension_numbers = #tpu.dot_dimension_numbers<[1], [0], [0], [1], [0, 0, 1, 1], [], []>} : vector<64x32xbf16>, vector<32x32xbf16>, vector<64x32xf32> -> vector<64x32xf32>
    %c0_19 = arith.constant 0 : index
    %c0_20 = arith.constant 0 : index
    %20 = vector.load %arg10[%c0_19, %c0_20] : memref<128x32xf32, #tpu.memory_space<vmem>>, vector<128x32xf32>
    tpu.vector_store %arg10[%c0_19, %c0_20], %12 {strides = array<i32>} : memref<128x32xf32, #tpu.memory_space<vmem>>, vector<128x32xf32>,
    %c0_21 = arith.constant 0 : index
    %c0_22 = arith.constant 0 : index
    %21 = vector.load %arg11[%c0_21, %c0_22] : memref<64x32xf32, #tpu.memory_space<vmem>>, vector<64x32xf32>
    tpu.vector_store %arg11[%c0_21, %c0_22], %19 {strides = array<i32>} : memref<64x32xf32, #tpu.memory_space<vmem>>, vector<64x32xf32>,
    %c0_23 = arith.constant 0 : index
    %c0_24 = arith.constant 0 : index
    %22 = vector.load %arg8[%c0_23, %c0_24] : memref<128x16xf32, #tpu.memory_space<vmem>>, vector<128x16xf32>
    %23 = vector.extract_strided_slice %12 {offsets = [0, 16], sizes = [128, 16], strides = [1, 1]} : vector<128x32xf32> to vector<128x16xf32>
    %24 = math.exp %23 : vector<128x16xf32>
    %25 = arith.mulf %22, %24 : vector<128x16xf32>
    %26 = vector.extract_strided_slice %12 {offsets = [0, 0], sizes = [128, 16], strides = [1, 1]} : vector<128x32xf32> to vector<128x16xf32>
    %27 = arith.addf %25, %26 : vector<128x16xf32>
    %28 = arith.truncf %27 : vector<128x16xf32> to vector<128x16xbf16>
    %c0_25 = arith.constant 0 : index
    %c0_26 = arith.constant 0 : index
    %29 = vector.load %arg9[%c0_25, %c0_26] : memref<64x16xf32, #tpu.memory_space<vmem>>, vector<64x16xf32>
    %30 = vector.extract_strided_slice %19 {offsets = [0, 16], sizes = [64, 16], strides = [1, 1]} : vector<64x32xf32> to vector<64x16xf32>
    %31 = math.exp %30 : vector<64x16xf32>
    %32 = arith.mulf %29, %31 : vector<64x16xf32>
    %33 = vector.extract_strided_slice %19 {offsets = [0, 0], sizes = [64, 16], strides = [1, 1]} : vector<64x32xf32> to vector<64x16xf32>
    %34 = arith.addf %32, %33 : vector<64x16xf32>
    %35 = arith.truncf %34 : vector<64x16xf32> to vector<64x16xbf16>
    %cst_27 = arith.constant dense<0.000000e+00> : vector<128x128xf32>
    %36 = tpu.matmul %28, %28, %cst_27 {dimension_numbers = #tpu.dot_dimension_numbers<[1], [1], [0], [0], [0, 0, 1, 0], [], []>} : vector<128x16xbf16>, vector<128x16xbf16>, vector<128x128xf32> -> vector<128x128xf32>
    %37 = arith.truncf %36 : vector<128x128xf32> to vector<128x128xbf16>
    %c0_28 = arith.constant 0 : index
    %c0_29 = arith.constant 0 : index
    %38 = vector.load %arg12[%c0_28, %c0_29] : memref<128x128xbf16, #tpu.memory_space<vmem>>, vector<128x128xbf16>
    tpu.vector_store %arg12[%c0_28, %c0_29], %37 {strides = array<i32>} : memref<128x128xbf16, #tpu.memory_space<vmem>>, vector<128x128xbf16>,
    %cst_30 = arith.constant dense<0.000000e+00> : vector<128x64xf32>
    %39 = tpu.matmul %28, %35, %cst_30 {dimension_numbers = #tpu.dot_dimension_numbers<[1], [1], [0], [0], [0, 0, 1, 0], [], []>} : vector<128x16xbf16>, vector<64x16xbf16>, vector<128x64xf32> -> vector<128x64xf32>
    %40 = arith.truncf %39 : vector<128x64xf32> to vector<128x64xbf16>
    %c0_31 = arith.constant 0 : index
    %c0_32 = arith.constant 0 : index
    %41 = vector.load %arg13[%c0_31, %c0_32] : memref<128x64xbf16, #tpu.memory_space<vmem>>, vector<128x64xbf16>
    tpu.vector_store %arg13[%c0_31, %c0_32], %40 {strides = array<i32>} : memref<128x64xbf16, #tpu.memory_space<vmem>>, vector<128x64xbf16>,
    return
  }
  func.func @transform_0(%arg0: i32) -> (i32, i32) {
    %c0_i32 = arith.constant 0 : i32
    %c0_i32_0 = arith.constant 0 : i32
    %c0_i32_1 = arith.constant 0 : i32
    return %c0_i32, %c0_i32_0 : i32, i32
  }
  func.func @transform_1(%arg0: i32) -> (i32, i32) {
    %c0_i32 = arith.constant 0 : i32
    %c0_i32_0 = arith.constant 0 : i32
    %c0_i32_1 = arith.constant 0 : i32
    return %c0_i32, %c0_i32_0 : i32, i32
  }
  func.func @transform_2(%arg0: i32) -> (i32, i32) {
    %c0_i32 = arith.constant 0 : i32
    %c0_i32_0 = arith.constant 0 : i32
    %c0_i32_1 = arith.constant 0 : i32
    return %c0_i32, %c0_i32_0 : i32, i32
  }
  func.func @transform_3(%arg0: i32) -> (i32, i32) {
    %c0_i32 = arith.constant 0 : i32
    %c0_i32_0 = arith.constant 0 : i32
    %c0_i32_1 = arith.constant 0 : i32
    return %c0_i32, %c0_i32_0 : i32, i32
  }
  func.func @transform_4(%arg0: i32) -> (i32, i32) {
    %c0_i32 = arith.constant 0 : i32
    %c0_i32_0 = arith.constant 0 : i32
    %c0_i32_1 = arith.constant 0 : i32
    return %c0_i32, %c0_i32_0 : i32, i32
  }
  func.func @transform_5(%arg0: i32) -> (i32, i32) {
    %c0_i32 = arith.constant 0 : i32
    %c0_i32_0 = arith.constant 0 : i32
    %c0_i32_1 = arith.constant 0 : i32
    return %c0_i32, %c0_i32_0 : i32, i32
  }
  func.func @transform_6(%arg0: i32) -> (i32, i32) {
    %c0_i32 = arith.constant 0 : i32
    %c0_i32_0 = arith.constant 0 : i32
    %c0_i32_1 = arith.constant 0 : i32
    return %c0_i32, %c0_i32_0 : i32, i32
  }
  func.func @transform_7(%arg0: i32) -> (i32, i32) {
    %c0_i32 = arith.constant 0 : i32
    %c0_i32_0 = arith.constant 0 : i32
    %c0_i32_1 = arith.constant 0 : i32
    return %c0_i32, %c0_i32_0 : i32, i32
  }
  func.func @transform_8(%arg0: i32) -> (i32, i32) {
    %c0_i32 = arith.constant 0 : i32
    %c0_i32_0 = arith.constant 0 : i32
    %c0_i32_1 = arith.constant 0 : i32
    return %c0_i32, %c0_i32_0 : i32, i32
  }
  func.func @transform_9(%arg0: i32) -> (i32, i32) {
    %c0_i32 = arith.constant 0 : i32
    %c0_i32_0 = arith.constant 0 : i32
    %c0_i32_1 = arith.constant 0 : i32
    return %c0_i32, %c0_i32_0 : i32, i32
  }
  func.func @transform_10(%arg0: i32) -> (i32, i32) {
    %c0_i32 = arith.constant 0 : i32
    %c0_i32_0 = arith.constant 0 : i32
    %c0_i32_1 = arith.constant 0 : i32
    return %c0_i32, %c0_i32_0 : i32, i32
  }
  func.func @transform_11(%arg0: i32) -> (i32, i32) {
    %c0_i32 = arith.constant 0 : i32
    %c0_i32_0 = arith.constant 0 : i32
    %c0_i32_1 = arith.constant 0 : i32
    return %c0_i32, %c0_i32_0 : i32, i32
  }
  func.func @transform_12(%arg0: i32) -> (i32, i32) {
    %c0_i32 = arith.constant 0 : i32
    %c0_i32_0 = arith.constant 0 : i32
    %c0_i32_1 = arith.constant 0 : i32
    return %c0_i32, %c0_i32_0 : i32, i32
  }
}

</mosaic_0001>

<llo_original>
// kernel: tpu_custom_call.1
$region0: #{tpu_custom_call.1}
  #allocation0 [shape = 'u32[]', space=smem, size = 0x4, offset = 0x4, fixed_abs, tag = 'smem constant byte address 0x4 - core index']
  #allocation1 [shape = 'u32[72,128]{1,0:T(1,128)}', space=vmem, size = 0x9000, scoped, tag = 'internal scratch']
  %s0 = inlined_call_operand.vmem [shape: bf16[128,64], index: 0, kind: input, shape index: {}]
  %s1 = inlined_call_operand.vmem [shape: bf16[64,128], index: 1, kind: input, shape index: {}]
  %s2 = inlined_call_operand.vmem [shape: bf16[128,128], index: 2, kind: input, shape index: {}]
  %s3 = inlined_call_operand.vmem [shape: bf16[64,32], index: 3, kind: input, shape index: {}]
  %s4 = inlined_call_operand.vmem [shape: bf16[32,32], index: 4, kind: input, shape index: {}]
  %s5 = inlined_call_operand.vmem [shape: bf16[128,32], index: 5, kind: input, shape index: {}]
  %s6 = inlined_call_operand.vmem [shape: bf16[32,32], index: 6, kind: input, shape index: {}]
  %s7 = inlined_call_operand.vmem [shape: f32[128,16], index: 7, kind: input, shape index: {}]
  %s8 = inlined_call_operand.vmem [shape: f32[64,16], index: 8, kind: input, shape index: {}]
  %s9 = inlined_call_operand.vmem [shape: f32[128,32], index: 9, kind: output, shape index: {0}]
  %s10 = inlined_call_operand.vmem [shape: f32[64,32], index: 10, kind: output, shape index: {1}]
  %s11 = inlined_call_operand.hbm [shape: bf16[128,128], index: 11, kind: output, shape index: {2}]
  %s12 = inlined_call_operand.vmem [shape: bf16[128,64], index: 12, kind: output, shape index: {3}]
  %13 = xla_tuple %s9, %s10, %s11, %s12
  %s14 = sld [smem:[#allocation0]]
  $region70: #{tpu_custom_call.1} parent=0
    _
  %s16 = ssub.s32 1, %s14
  %s17 = scalar_select 0, %s16, %s14
  $region1: #{tpu_custom_call.1} parent=0
    #allocation2 [shape = 'u8[32768]{0}', space=vmem, size = 0x8000, scoped, tag = 'output window, operand 2, single buffered']
    #allocation3 [shape = 's32[1]{0}', space=sflag, size = 0x4, scoped, tag = 'scoped memory for tpu_custom_call.1']
    %18 = vsyncpa [#allocation3], 0
    // Predicated region
    $region2: #{tpu_custom_call.1} parent=1 // pred_check
      _
    $region3: #{tpu_custom_call.1} parent=1 // pred_check_branch
      %20 = sbr.rel (0) target = $region5
    $region4: #{tpu_custom_call.1} parent=1 // pred_region
      _
    $region5: #{tpu_custom_call.1} parent=1 // pred_fallthru
      _
    // Predicated region
    $region6: #{tpu_custom_call.1} parent=1 // pred_check
      _
    $region7: #{tpu_custom_call.1} parent=1 // pred_check_branch
      %22 = sbr.rel (0) target = $region9
    $region8: #{tpu_custom_call.1} parent=1 // pred_region
      _
    $region9: #{tpu_custom_call.1} parent=1 // pred_fallthru
      _
    // Predicated region
    $region10: #{tpu_custom_call.1} parent=1 // pred_check
      _
    $region11: #{tpu_custom_call.1} parent=1 // pred_check_branch
      %24 = sbr.rel (0) target = $region13
    $region12: #{tpu_custom_call.1} parent=1 // pred_region
      _
    $region13: #{tpu_custom_call.1} parent=1 // pred_fallthru
      _
    // Predicated region
    $region14: #{tpu_custom_call.1} parent=1 // pred_check
      _
    $region15: #{tpu_custom_call.1} parent=1 // pred_check_branch
      %26 = sbr.rel (0) target = $region17
    $region16: #{tpu_custom_call.1} parent=1 // pred_region
      _
    $region17: #{tpu_custom_call.1} parent=1 // pred_fallthru
      _
    // Predicated region
    $region18: #{tpu_custom_call.1} parent=1 // pred_check
      _
    $region19: #{tpu_custom_call.1} parent=1 // pred_check_branch
      %28 = sbr.rel (0) target = $region21
    $region20: #{tpu_custom_call.1} parent=1 // pred_region
      _
    $region21: #{tpu_custom_call.1} parent=1 // pred_fallthru
      _
    // Predicated region
    $region22: #{tpu_custom_call.1} parent=1 // pred_check
      _
    $region23: #{tpu_custom_call.1} parent=1 // pred_check_branch
      %30 = sbr.rel (0) target = $region25
    $region24: #{tpu_custom_call.1} parent=1 // pred_region
      _
    $region25: #{tpu_custom_call.1} parent=1 // pred_fallthru
      _
    // Predicated region
    $region26: #{tpu_custom_call.1} parent=1 // pred_check
      _
    $region27: #{tpu_custom_call.1} parent=1 // pred_check_branch
      %32 = sbr.rel (0) target = $region29
    $region28: #{tpu_custom_call.1} parent=1 // pred_region
      _
    $region29: #{tpu_custom_call.1} parent=1 // pred_fallthru
      _
    // Predicated region
    $region30: #{tpu_custom_call.1} parent=1 // pred_check
      _
    $region31: #{tpu_custom_call.1} parent=1 // pred_check_branch
      %34 = sbr.rel (0) target = $region33
    $region32: #{tpu_custom_call.1} parent=1 // pred_region
      _
    $region33: #{tpu_custom_call.1} parent=1 // pred_fallthru
      _
    // Predicated region
    $region34: #{tpu_custom_call.1} parent=1 // pred_check
      _
    $region35: #{tpu_custom_call.1} parent=1 // pred_check_branch
      %36 = sbr.rel (0) target = $region37
    $region36: #{tpu_custom_call.1} parent=1 // pred_region
      _
    $region37: #{tpu_custom_call.1} parent=1 // pred_fallthru
      _
    %v38 = vld [vmem:[%s2] sm:$0xf]
    %v39 = vld [vmem:[%s2 + $0x4] sm:$0xf]
    %v40 = vld [vmem:[%s2 + $0x8] sm:$0xf]
    %v41 = vld [vmem:[%s2 + $0xc] sm:$0xf]
    %v42 = vld [vmem:[%s2 + $0x10] sm:$0xf]
    %v43 = vld [vmem:[%s2 + $0x14] sm:$0xf]
    %v44 = vld [vmem:[%s2 + $0x18] sm:$0xf]
    %v45 = vld [vmem:[%s2 + $0x1c] sm:$0xf]
    %v46 = vld [vmem:[%s2 + $0x20] sm:$0xf]
    %v47 = vld [vmem:[%s2 + $0x24] sm:$0xf]
    %v48 = vld [vmem:[%s2 + $0x28] sm:$0xf]
    %v49 = vld [vmem:[%s2 + $0x2c] sm:$0xf]
    %v50 = vld [vmem:[%s2 + $0x30] sm:$0xf]
    %v51 = vld [vmem:[%s2 + $0x34] sm:$0xf]
    %v52 = vld [vmem:[%s2 + $0x38] sm:$0xf]
    %v53 = vld [vmem:[%s2 + $0x3c] sm:$0xf]
    %v54 = vld [vmem:[%s0] sm:$0xf]
    %v55 = vld [vmem:[%s0 + $0x4] sm:$0xf]
    %v56 = vld [vmem:[%s0 + $0x8] sm:$0xf]
    %v57 = vld [vmem:[%s0 + $0xc] sm:$0xf]
    %v58 = vld [vmem:[%s0 + $0x10] sm:$0xf]
    %v59 = vld [vmem:[%s0 + $0x14] sm:$0xf]
    %v60 = vld [vmem:[%s0 + $0x18] sm:$0xf]
    %v61 = vld [vmem:[%s0 + $0x1c] sm:$0xf]
    %v62 = vld [vmem:[%s0 + $0x20] sm:$0xf]
    %v63 = vld [vmem:[%s0 + $0x24] sm:$0xf]
    %v64 = vld [vmem:[%s0 + $0x28] sm:$0xf]
    %v65 = vld [vmem:[%s0 + $0x2c] sm:$0xf]
    %v66 = vld [vmem:[%s0 + $0x30] sm:$0xf]
    %v67 = vld [vmem:[%s0 + $0x34] sm:$0xf]
    %v68 = vld [vmem:[%s0 + $0x38] sm:$0xf]
    %v69 = vld [vmem:[%s0 + $0x3c] sm:$0xf]
    %v70 = vld [vmem:[%s3] sm:$0xf]
    %v71 = vld [vmem:[%s3 + $0x4] sm:$0xf]
    %v72 = vld [vmem:[%s3 + $0x8] sm:$0xf]
    %v73 = vld [vmem:[%s3 + $0xc] sm:$0xf]
    %v74 = vld [vmem:[%s3 + $0x10] sm:$0xf]
    %v75 = vld [vmem:[%s3 + $0x14] sm:$0xf]
    %v76 = vld [vmem:[%s3 + $0x18] sm:$0xf]
    %v77 = vld [vmem:[%s3 + $0x1c] sm:$0xf]
    %v94 = vunpack.c.l.b16 %v54
    %v95 = vunpack.c.l.b16 %v55
    %v96 = vunpack.c.l.b16 %v56
    %v97 = vunpack.c.l.b16 %v57
    %v98 = vunpack.c.l.b16 %v58
    %v99 = vunpack.c.l.b16 %v59
    %v100 = vunpack.c.l.b16 %v60
    %v101 = vunpack.c.l.b16 %v61
    %v102 = vunpack.c.l.b16 %v62
    %v103 = vunpack.c.l.b16 %v63
    %v104 = vunpack.c.l.b16 %v64
    %v105 = vunpack.c.l.b16 %v65
    %v106 = vunpack.c.l.b16 %v66
    %v107 = vunpack.c.l.b16 %v67
    %v108 = vunpack.c.l.b16 %v68
    %v109 = vunpack.c.l.b16 %v69
    %v110 = vpack.c.b16 %v95, %v94
    %v111 = vpack.c.b16 %v97, %v96
    %v112 = vpack.c.b16 %v99, %v98
    %v113 = vpack.c.b16 %v101, %v100
    %v114 = vpack.c.b16 %v103, %v102
    %v115 = vpack.c.b16 %v105, %v104
    %v116 = vpack.c.b16 %v107, %v106
    %v117 = vpack.c.b16 %v109, %v108
    %v126 = vunpack.c.l.b16 %v70
    %v127 = vunpack.c.l.b16 %v71
    %v128 = vunpack.c.l.b16 %v72
    %v129 = vunpack.c.l.b16 %v73
    %v130 = vunpack.c.l.b16 %v74
    %v131 = vunpack.c.l.b16 %v75
    %v132 = vunpack.c.l.b16 %v76
    %v133 = vunpack.c.l.b16 %v77
    %v134 = vpack.c.b16 %v127, %v126
    %v135 = vpack.c.b16 %v129, %v128
    %v136 = vpack.c.b16 %v131, %v130
    %v137 = vpack.c.b16 %v133, %v132
    %vm142 = vcmask 523264
    %v144 = vsel %vm142, %v110, 0
    %v147 = vsel %vm142, %v111, 0
    %v150 = vsel %vm142, %v112, 0
    %v153 = vsel %vm142, %v113, 0
    %v156 = vsel %vm142, %v114, 0
    %v159 = vsel %vm142, %v115, 0
    %v162 = vsel %vm142, %v116, 0
    %v165 = vsel %vm142, %v117, 0
    %167 = vmatpush.bf16.msra.mxu0 0
    %168 = vmatpush.bf16.msra.mxu0 0
    %169 = vmatpush.bf16.msra.mxu0 0
    %170 = vmatpush.bf16.msra.mxu0 0
    %171 = vmatpush.bf16.msra.mxu0 %v137
    %172 = vmatpush.bf16.msra.mxu0 %v136
    %173 = vmatpush.bf16.msra.mxu0 %v135
    %174 = vmatpush.bf16.msra.mxu0 %v134
    %175 = vmatmul.bf16.gmra.mxu0 %v144
    %v176 = vpop.f32.mrf.mxu0
    %v177 = vadd.f32 0.0, %v176
    %v178 = vpop.f32.mrf.mxu0
    %v179 = vadd.f32 0.0, %v178
    %180 = vmatmul.bf16.gmra.mxu0 %v147
    %v181 = vpop.f32.mrf.mxu0
    %v182 = vadd.f32 0.0, %v181
    %v183 = vpop.f32.mrf.mxu0
    %v184 = vadd.f32 0.0, %v183
    %185 = vmatmul.bf16.gmra.mxu0 %v150
    %v186 = vpop.f32.mrf.mxu0
    %v187 = vadd.f32 0.0, %v186
    %v188 = vpop.f32.mrf.mxu0
    %v189 = vadd.f32 0.0, %v188
    %190 = vmatmul.bf16.gmra.mxu0 %v153
    %v191 = vpop.f32.mrf.mxu0
    %v192 = vadd.f32 0.0, %v191
    %v193 = vpop.f32.mrf.mxu0
    %v194 = vadd.f32 0.0, %v193
    %195 = vmatmul.bf16.gmra.mxu0 %v156
    %v196 = vpop.f32.mrf.mxu0
    %v197 = vadd.f32 0.0, %v196
    %v198 = vpop.f32.mrf.mxu0
    %v199 = vadd.f32 0.0, %v198
    %200 = vmatmul.bf16.gmra.mxu0 %v159
    %v201 = vpop.f32.mrf.mxu0
    %v202 = vadd.f32 0.0, %v201
    %v203 = vpop.f32.mrf.mxu0
    %v204 = vadd.f32 0.0, %v203
    %205 = vmatmul.bf16.gmra.mxu0 %v162
    %v206 = vpop.f32.mrf.mxu0
    %v207 = vadd.f32 0.0, %v206
    %v208 = vpop.f32.mrf.mxu0
    %v209 = vadd.f32 0.0, %v208
    %210 = vmatmul.bf16.gmra.mxu0 %v165
    %v211 = vpop.f32.mrf.mxu0
    %v212 = vadd.f32 0.0, %v211
    %v213 = vpop.f32.mrf.mxu0
    %v214 = vadd.f32 0.0, %v213
    %215 = vdwg.mxu0
    %v216 = vpack.c.bf16 %v179, %v177
    %v217 = vpack.c.bf16 %v184, %v182
    %v218 = vpack.c.bf16 %v189, %v187
    %v219 = vpack.c.bf16 %v194, %v192
    %v220 = vpack.c.bf16 %v199, %v197
    %v221 = vpack.c.bf16 %v204, %v202
    %v222 = vpack.c.bf16 %v209, %v207
    %v223 = vpack.c.bf16 %v214, %v212
    %v240 = vunpack.c.l.b16 %v38
    %v241 = vunpack.c.l.b16 %v39
    %v242 = vunpack.c.l.b16 %v40
    %v243 = vunpack.c.l.b16 %v41
    %v244 = vunpack.c.l.b16 %v42
    %v245 = vunpack.c.l.b16 %v43
    %v246 = vunpack.c.l.b16 %v44
    %v247 = vunpack.c.l.b16 %v45
    %v248 = vunpack.c.l.b16 %v46
    %v249 = vunpack.c.l.b16 %v47
    %v250 = vunpack.c.l.b16 %v48
    %v251 = vunpack.c.l.b16 %v49
    %v252 = vunpack.c.l.b16 %v50
    %v253 = vunpack.c.l.b16 %v51
    %v254 = vunpack.c.l.b16 %v52
    %v255 = vunpack.c.l.b16 %v53
    %v256 = vpack.c.b16 %v241, %v240
    %v257 = vpack.c.b16 %v243, %v242
    %v258 = vpack.c.b16 %v245, %v244
    %v259 = vpack.c.b16 %v247, %v246
    %v260 = vpack.c.b16 %v249, %v248
    %v261 = vpack.c.b16 %v251, %v250
    %v262 = vpack.c.b16 %v253, %v252
    %v263 = vpack.c.b16 %v255, %v254
    %272 = vmatpush.bf16.msra.mxu0 %v223
    %273 = vmatpush.bf16.msra.mxu0 %v222
    %274 = vmatpush.bf16.msra.mxu0 %v221
    %275 = vmatpush.bf16.msra.mxu0 %v220
    %276 = vmatpush.bf16.msra.mxu0 %v219
    %277 = vmatpush.bf16.msra.mxu0 %v218
    %278 = vmatpush.bf16.msra.mxu0 %v217
    %279 = vmatpush.bf16.msra.mxu0 %v216
    %280 = vmatmul.bf16.gmra.mxu0 %v256
    %v281 = vpop.f32.mrf.mxu0
    %v282 = vadd.f32 0.0, %v281
    %v283 = vpop.f32.mrf.mxu0
    %v284 = vadd.f32 0.0, %v283
    %285 = vmatmul.bf16.gmra.mxu0 %v257
    %v286 = vpop.f32.mrf.mxu0
    %v287 = vadd.f32 0.0, %v286
    %v288 = vpop.f32.mrf.mxu0
    %v289 = vadd.f32 0.0, %v288
    %290 = vmatmul.bf16.gmra.mxu0 %v258
    %v291 = vpop.f32.mrf.mxu0
    %v292 = vadd.f32 0.0, %v291
    %v293 = vpop.f32.mrf.mxu0
    %v294 = vadd.f32 0.0, %v293
    %295 = vmatmul.bf16.gmra.mxu0 %v259
    %v296 = vpop.f32.mrf.mxu0
    %v297 = vadd.f32 0.0, %v296
    %v298 = vpop.f32.mrf.mxu0
    %v299 = vadd.f32 0.0, %v298
    %300 = vmatmul.bf16.gmra.mxu0 %v260
    %v301 = vpop.f32.mrf.mxu0
    %v302 = vadd.f32 0.0, %v301
    %v303 = vpop.f32.mrf.mxu0
    %v304 = vadd.f32 0.0, %v303
    %305 = vmatmul.bf16.gmra.mxu0 %v261
    %v306 = vpop.f32.mrf.mxu0
    %v307 = vadd.f32 0.0, %v306
    %v308 = vpop.f32.mrf.mxu0
    %v309 = vadd.f32 0.0, %v308
    %310 = vmatmul.bf16.gmra.mxu0 %v262
    %v311 = vpop.f32.mrf.mxu0
    %v312 = vadd.f32 0.0, %v311
    %v313 = vpop.f32.mrf.mxu0
    %v314 = vadd.f32 0.0, %v313
    %315 = vmatmul.bf16.gmra.mxu0 %v263
    %v316 = vpop.f32.mrf.mxu0
    %v317 = vadd.f32 0.0, %v316
    %v318 = vpop.f32.mrf.mxu0
    %v319 = vadd.f32 0.0, %v318
    %320 = vdwg.mxu0
    %v321 = vmax.f32 %v282, 0.0
    %v322 = vmax.f32 %v284, 0.0
    %v323 = vmax.f32 %v287, 0.0
    %v324 = vmax.f32 %v289, 0.0
    %v325 = vmax.f32 %v292, 0.0
    %v326 = vmax.f32 %v294, 0.0
    %v327 = vmax.f32 %v297, 0.0
    %v328 = vmax.f32 %v299, 0.0
    %v329 = vmax.f32 %v302, 0.0
    %v330 = vmax.f32 %v304, 0.0
    %v331 = vmax.f32 %v307, 0.0
    %v332 = vmax.f32 %v309, 0.0
    %v333 = vmax.f32 %v312, 0.0
    %v334 = vmax.f32 %v314, 0.0
    %v335 = vmax.f32 %v317, 0.0
    %v336 = vmax.f32 %v319, 0.0
    %v337 = vpack.c.bf16 %v322, %v321
    %v338 = vpack.c.bf16 %v324, %v323
    %v339 = vpack.c.bf16 %v326, %v325
    %v340 = vpack.c.bf16 %v328, %v327
    %v341 = vpack.c.bf16 %v330, %v329
    %v342 = vpack.c.bf16 %v332, %v331
    %v343 = vpack.c.bf16 %v334, %v333
    %v344 = vpack.c.bf16 %v336, %v335
    %v345 = vld [vmem:[%s4] sm:$0xf]
    %v346 = vld [vmem:[%s4 + $0x4] sm:$0xf]
    %v347 = vld [vmem:[%s4 + $0x8] sm:$0xf]
    %v348 = vld [vmem:[%s4 + $0xc] sm:$0xf]
    %v353 = vunpack.c.l.b16 %v345
    %v354 = vunpack.c.l.b16 %v346
    %v355 = vunpack.c.l.b16 %v347
    %v356 = vunpack.c.l.b16 %v348
    %v357 = vpack.c.b16 %v354, %v353
    %v358 = vpack.c.b16 %v356, %v355
    %vm361 = vcmask 261120
    %v363 = vsel %vm361, %v337, 0
    %v366 = vsel %vm361, %v338, 0
    %v369 = vsel %vm361, %v339, 0
    %v372 = vsel %vm361, %v340, 0
    %v375 = vsel %vm361, %v341, 0
    %v378 = vsel %vm361, %v342, 0
    %v381 = vsel %vm361, %v343, 0
    %v384 = vsel %vm361, %v344, 0
    %386 = vmatpush.bf16.msra.mxu0 0
    %387 = vmatpush.bf16.msra.mxu0 0
    %388 = vmatpush.bf16.msra.mxu0 0
    %389 = vmatpush.bf16.msra.mxu0 0
    %390 = vmatpush.bf16.msra.mxu0 0
    %391 = vmatpush.bf16.msra.mxu0 0
    %392 = vmatpush.bf16.msra.mxu0 %v358
    %393 = vmatpush.bf16.msra.mxu0 %v357
    %394 = vmatmul.bf16.gmra.mxu0 %v363
    %v395 = vpop.f32.mrf.mxu0
    %v396 = vadd.f32 0.0, %v395
    %v397 = vpop.f32.mrf.mxu0
    %v398 = vadd.f32 0.0, %v397
    %399 = vmatmul.bf16.gmra.mxu0 %v366
    %v400 = vpop.f32.mrf.mxu0
    %v401 = vadd.f32 0.0, %v400
    %v402 = vpop.f32.mrf.mxu0
    %v403 = vadd.f32 0.0, %v402
    %404 = vmatmul.bf16.gmra.mxu0 %v369
    %v405 = vpop.f32.mrf.mxu0
    %v406 = vadd.f32 0.0, %v405
    %v407 = vpop.f32.mrf.mxu0
    %v408 = vadd.f32 0.0, %v407
    %409 = vmatmul.bf16.gmra.mxu0 %v372
    %v410 = vpop.f32.mrf.mxu0
    %v411 = vadd.f32 0.0, %v410
    %v412 = vpop.f32.mrf.mxu0
    %v413 = vadd.f32 0.0, %v412
    %414 = vmatmul.bf16.gmra.mxu0 %v375
    %v415 = vpop.f32.mrf.mxu0
    %v416 = vadd.f32 0.0, %v415
    %v417 = vpop.f32.mrf.mxu0
    %v418 = vadd.f32 0.0, %v417
    %419 = vmatmul.bf16.gmra.mxu0 %v378
    %v420 = vpop.f32.mrf.mxu0
    %v421 = vadd.f32 0.0, %v420
    %v422 = vpop.f32.mrf.mxu0
    %v423 = vadd.f32 0.0, %v422
    %424 = vmatmul.bf16.gmra.mxu0 %v381
    %v425 = vpop.f32.mrf.mxu0
    %v426 = vadd.f32 0.0, %v425
    %v427 = vpop.f32.mrf.mxu0
    %v428 = vadd.f32 0.0, %v427
    %429 = vmatmul.bf16.gmra.mxu0 %v384
    %v430 = vpop.f32.mrf.mxu0
    %v431 = vadd.f32 0.0, %v430
    %v432 = vpop.f32.mrf.mxu0
    %v433 = vadd.f32 0.0, %v432
    %434 = vdwg.mxu0
    %v435 = vpack.c.bf16 %v398, %v396
    %v436 = vpack.c.bf16 %v403, %v401
    %v437 = vpack.c.bf16 %v408, %v406
    %v438 = vpack.c.bf16 %v413, %v411
    %v439 = vpack.c.bf16 %v418, %v416
    %v440 = vpack.c.bf16 %v423, %v421
    %v441 = vpack.c.bf16 %v428, %v426
    %v442 = vpack.c.bf16 %v433, %v431
    %443 = vmatpush.bf16.msra.mxu0 %v442
    %444 = vmatpush.bf16.msra.mxu0 %v441
    %445 = vmatpush.bf16.msra.mxu0 %v440
    %446 = vmatpush.bf16.msra.mxu0 %v439
    %447 = vmatpush.bf16.msra.mxu0 %v438
    %448 = vmatpush.bf16.msra.mxu0 %v437
    %449 = vmatpush.bf16.msra.mxu0 %v436
    %450 = vmatpush.bf16.msra.mxu0 %v435
    %451 = vmatmul.bf16.gmra.mxu0 %v256
    %v452 = vpop.f32.mrf.mxu0
    %v453 = vadd.f32 0.0, %v452
    %v454 = vpop.f32.mrf.mxu0
    %v455 = vadd.f32 0.0, %v454
    %456 = vmatmul.bf16.gmra.mxu0 %v257
    %v457 = vpop.f32.mrf.mxu0
    %v458 = vadd.f32 0.0, %v457
    %v459 = vpop.f32.mrf.mxu0
    %v460 = vadd.f32 0.0, %v459
    %461 = vmatmul.bf16.gmra.mxu0 %v258
    %v462 = vpop.f32.mrf.mxu0
    %v463 = vadd.f32 0.0, %v462
    %v464 = vpop.f32.mrf.mxu0
    %v465 = vadd.f32 0.0, %v464
    %466 = vmatmul.bf16.gmra.mxu0 %v259
    %v467 = vpop.f32.mrf.mxu0
    %v468 = vadd.f32 0.0, %v467
    %v469 = vpop.f32.mrf.mxu0
    %v470 = vadd.f32 0.0, %v469
    %471 = vmatmul.bf16.gmra.mxu0 %v260
    %v472 = vpop.f32.mrf.mxu0
    %v473 = vadd.f32 0.0, %v472
    %v474 = vpop.f32.mrf.mxu0
    %v475 = vadd.f32 0.0, %v474
    %476 = vmatmul.bf16.gmra.mxu0 %v261
    %v477 = vpop.f32.mrf.mxu0
    %v478 = vadd.f32 0.0, %v477
    %v479 = vpop.f32.mrf.mxu0
    %v480 = vadd.f32 0.0, %v479
    %481 = vmatmul.bf16.gmra.mxu0 %v262
    %v482 = vpop.f32.mrf.mxu0
    %v483 = vadd.f32 0.0, %v482
    %v484 = vpop.f32.mrf.mxu0
    %v485 = vadd.f32 0.0, %v484
    %486 = vmatmul.bf16.gmra.mxu0 %v263
    %v487 = vpop.f32.mrf.mxu0
    %v488 = vadd.f32 0.0, %v487
    %v489 = vpop.f32.mrf.mxu0
    %v490 = vadd.f32 0.0, %v489
    %491 = vdwg.mxu0
    %v492 = vld [vmem:[%s1] sm:$0xf]
    %v493 = vld [vmem:[%s1 + $0x4] sm:$0xf]
    %v494 = vld [vmem:[%s1 + $0x8] sm:$0xf]
    %v495 = vld [vmem:[%s1 + $0xc] sm:$0xf]
    %v496 = vld [vmem:[%s1 + $0x10] sm:$0xf]
    %v497 = vld [vmem:[%s1 + $0x14] sm:$0xf]
    %v498 = vld [vmem:[%s1 + $0x18] sm:$0xf]
    %v499 = vld [vmem:[%s1 + $0x1c] sm:$0xf]
    %v500 = vld [vmem:[%s5] sm:$0xf]
    %v501 = vld [vmem:[%s5 + $0x4] sm:$0xf]
    %v502 = vld [vmem:[%s5 + $0x8] sm:$0xf]
    %v503 = vld [vmem:[%s5 + $0xc] sm:$0xf]
    %v504 = vld [vmem:[%s5 + $0x10] sm:$0xf]
    %v505 = vld [vmem:[%s5 + $0x14] sm:$0xf]
    %v506 = vld [vmem:[%s5 + $0x18] sm:$0xf]
    %v507 = vld [vmem:[%s5 + $0x1c] sm:$0xf]
    %v508 = vld [vmem:[%s5 + $0x20] sm:$0xf]
    %v509 = vld [vmem:[%s5 + $0x24] sm:$0xf]
    %v510 = vld [vmem:[%s5 + $0x28] sm:$0xf]
    %v511 = vld [vmem:[%s5 + $0x2c] sm:$0xf]
    %v512 = vld [vmem:[%s5 + $0x30] sm:$0xf]
    %v513 = vld [vmem:[%s5 + $0x34] sm:$0xf]
    %v514 = vld [vmem:[%s5 + $0x38] sm:$0xf]
    %v515 = vld [vmem:[%s5 + $0x3c] sm:$0xf]
    %v524 = vunpack.c.l.b16 %v492
    %v525 = vunpack.c.l.b16 %v493
    %v526 = vunpack.c.l.b16 %v494
    %v527 = vunpack.c.l.b16 %v495
    %v528 = vunpack.c.l.b16 %v496
    %v529 = vunpack.c.l.b16 %v497
    %v530 = vunpack.c.l.b16 %v498
    %v531 = vunpack.c.l.b16 %v499
    %v532 = vpack.c.b16 %v525, %v524
    %v533 = vpack.c.b16 %v527, %v526
    %v534 = vpack.c.b16 %v529, %v528
    %v535 = vpack.c.b16 %v531, %v530
    %v556 = vunpack.c.l.b16 %v500
    %v557 = vunpack.c.l.b16 %v501
    %v558 = vunpack.c.l.b16 %v502
    %v559 = vunpack.c.l.b16 %v503
    %v560 = vunpack.c.l.b16 %v504
    %v561 = vunpack.c.l.b16 %v505
    %v562 = vunpack.c.l.b16 %v506
    %v563 = vunpack.c.l.b16 %v507
    %v564 = vunpack.c.l.b16 %v508
    %v565 = vunpack.c.l.b16 %v509
    %v566 = vunpack.c.l.b16 %v510
    %v567 = vunpack.c.l.b16 %v511
    %v568 = vunpack.c.l.b16 %v512
    %v569 = vunpack.c.l.b16 %v513
    %v570 = vunpack.c.l.b16 %v514
    %v571 = vunpack.c.l.b16 %v515
    %v572 = vpack.c.b16 %v557, %v556
    %v573 = vpack.c.b16 %v559, %v558
    %v574 = vpack.c.b16 %v561, %v560
    %v575 = vpack.c.b16 %v563, %v562
    %v576 = vpack.c.b16 %v565, %v564
    %v577 = vpack.c.b16 %v567, %v566
    %v578 = vpack.c.b16 %v569, %v568
    %v579 = vpack.c.b16 %v571, %v570
    %588 = vmatpush.bf16.msra.mxu0 %v579
    %589 = vmatpush.bf16.msra.mxu0 %v578
    %590 = vmatpush.bf16.msra.mxu0 %v577
    %591 = vmatpush.bf16.msra.mxu0 %v576
    %592 = vmatpush.bf16.msra.mxu0 %v575
    %593 = vmatpush.bf16.msra.mxu0 %v574
    %594 = vmatpush.bf16.msra.mxu0 %v573
    %595 = vmatpush.bf16.msra.mxu0 %v572
    %596 = vmatmul.bf16.gmra.mxu0 %v532
    %v597 = vpop.f32.mrf.mxu0
    %v598 = vadd.f32 0.0, %v597
    %v599 = vpop.f32.mrf.mxu0
    %v600 = vadd.f32 0.0, %v599
    %601 = vmatmul.bf16.gmra.mxu0 %v533
    %v602 = vpop.f32.mrf.mxu0
    %v603 = vadd.f32 0.0, %v602
    %v604 = vpop.f32.mrf.mxu0
    %v605 = vadd.f32 0.0, %v604
    %606 = vmatmul.bf16.gmra.mxu0 %v534
    %v607 = vpop.f32.mrf.mxu0
    %v608 = vadd.f32 0.0, %v607
    %v609 = vpop.f32.mrf.mxu0
    %v610 = vadd.f32 0.0, %v609
    %611 = vmatmul.bf16.gmra.mxu0 %v535
    %v612 = vpop.f32.mrf.mxu0
    %v613 = vadd.f32 0.0, %v612
    %v614 = vpop.f32.mrf.mxu0
    %v615 = vadd.f32 0.0, %v614
    %616 = vdwg.mxu0
    %v617 = vtanh.pop %v598
    %v618 = vtanh.pop %v600
    %v619 = vtanh.pop %v603
    %v620 = vtanh.pop %v605
    %v621 = vtanh.pop %v608
    %v622 = vtanh.pop %v610
    %v623 = vtanh.pop %v613
    %v624 = vtanh.pop %v615
    %v625 = vpack.c.bf16 %v618, %v617
    %v626 = vpack.c.bf16 %v620, %v619
    %v627 = vpack.c.bf16 %v622, %v621
    %v628 = vpack.c.bf16 %v624, %v623
    %v629 = vld [vmem:[%s6] sm:$0xf]
    %v630 = vld [vmem:[%s6 + $0x4] sm:$0xf]
    %v631 = vld [vmem:[%s6 + $0x8] sm:$0xf]
    %v632 = vld [vmem:[%s6 + $0xc] sm:$0xf]
    %v637 = vunpack.c.l.b16 %v629
    %v638 = vunpack.c.l.b16 %v630
    %v639 = vunpack.c.l.b16 %v631
    %v640 = vunpack.c.l.b16 %v632
    %v641 = vpack.c.b16 %v638, %v637
    %v642 = vpack.c.b16 %v640, %v639
    %v646 = vsel %vm361, %v625, 0
    %v649 = vsel %vm361, %v626, 0
    %v652 = vsel %vm361, %v627, 0
    %v655 = vsel %vm361, %v628, 0
    %657 = vmatpush.bf16.msra.mxu0 0
    %658 = vmatpush.bf16.msra.mxu0 0
    %659 = vmatpush.bf16.msra.mxu0 0
    %660 = vmatpush.bf16.msra.mxu0 0
    %661 = vmatpush.bf16.msra.mxu0 0
    %662 = vmatpush.bf16.msra.mxu0 0
    %663 = vmatpush.bf16.msra.mxu0 %v642
    %664 = vmatpush.bf16.msra.mxu0 %v641
    %665 = vmatmul.bf16.gmra.mxu0 %v646
    %v666 = vpop.f32.mrf.mxu0
    %v667 = vadd.f32 0.0, %v666
    %v668 = vpop.f32.mrf.mxu0
    %v669 = vadd.f32 0.0, %v668
    %670 = vmatmul.bf16.gmra.mxu0 %v649
    %v671 = vpop.f32.mrf.mxu0
    %v672 = vadd.f32 0.0, %v671
    %v673 = vpop.f32.mrf.mxu0
    %v674 = vadd.f32 0.0, %v673
    %675 = vmatmul.bf16.gmra.mxu0 %v652
    %v676 = vpop.f32.mrf.mxu0
    %v677 = vadd.f32 0.0, %v676
    %v678 = vpop.f32.mrf.mxu0
    %v679 = vadd.f32 0.0, %v678
    %680 = vmatmul.bf16.gmra.mxu0 %v655
    %v681 = vpop.f32.mrf.mxu0
    %v682 = vadd.f32 0.0, %v681
    %v683 = vpop.f32.mrf.mxu0
    %v684 = vadd.f32 0.0, %v683
    %685 = vdwg.mxu0
    %686 = vst.msk [vmem:[%s9] sm:$0xff] %vm361, %v453
    %687 = vst.msk [vmem:[%s9 + $0x8] sm:$0xff] %vm361, %v455
    %688 = vst.msk [vmem:[%s9 + $0x10] sm:$0xff] %vm361, %v458
    %689 = vst.msk [vmem:[%s9 + $0x18] sm:$0xff] %vm361, %v460
    %690 = vst.msk [vmem:[%s9 + $0x20] sm:$0xff] %vm361, %v463
    %691 = vst.msk [vmem:[%s9 + $0x28] sm:$0xff] %vm361, %v465
    %692 = vst.msk [vmem:[%s9 + $0x30] sm:$0xff] %vm361, %v468
    %693 = vst.msk [vmem:[%s9 + $0x38] sm:$0xff] %vm361, %v470
    %694 = vst.msk [vmem:[%s9 + $0x40] sm:$0xff] %vm361, %v473
    %695 = vst.msk [vmem:[%s9 + $0x48] sm:$0xff] %vm361, %v475
    %696 = vst.msk [vmem:[%s9 + $0x50] sm:$0xff] %vm361, %v478
    %697 = vst.msk [vmem:[%s9 + $0x58] sm:$0xff] %vm361, %v480
    %698 = vst.msk [vmem:[%s9 + $0x60] sm:$0xff] %vm361, %v483
    %699 = vst.msk [vmem:[%s9 + $0x68] sm:$0xff] %vm361, %v485
    %700 = vst.msk [vmem:[%s9 + $0x70] sm:$0xff] %vm361, %v488
    %701 = vst.msk [vmem:[%s9 + $0x78] sm:$0xff] %vm361, %v490
    %702 = vst.msk [vmem:[%s10] sm:$0xff] %vm361, %v667
    %703 = vst.msk [vmem:[%s10 + $0x8] sm:$0xff] %vm361, %v669
    %704 = vst.msk [vmem:[%s10 + $0x10] sm:$0xff] %vm361, %v672
    %705 = vst.msk [vmem:[%s10 + $0x18] sm:$0xff] %vm361, %v674
    %706 = vst.msk [vmem:[%s10 + $0x20] sm:$0xff] %vm361, %v677
    %707 = vst.msk [vmem:[%s10 + $0x28] sm:$0xff] %vm361, %v679
    %708 = vst.msk [vmem:[%s10 + $0x30] sm:$0xff] %vm361, %v682
    %709 = vst.msk [vmem:[%s10 + $0x38] sm:$0xff] %vm361, %v684
    %v710 = vld [vmem:[%s7] sm:$0xff]
    %v711 = vld [vmem:[%s7 + $0x8] sm:$0xff]
    %v712 = vld [vmem:[%s7 + $0x10] sm:$0xff]
    %v713 = vld [vmem:[%s7 + $0x18] sm:$0xff]
    %v714 = vld [vmem:[%s7 + $0x20] sm:$0xff]
    %v715 = vld [vmem:[%s7 + $0x28] sm:$0xff]
    %v716 = vld [vmem:[%s7 + $0x30] sm:$0xff]
    %v717 = vld [vmem:[%s7 + $0x38] sm:$0xff]
    %v718 = vld [vmem:[%s7 + $0x40] sm:$0xff]
    %v719 = vld [vmem:[%s7 + $0x48] sm:$0xff]
    %v720 = vld [vmem:[%s7 + $0x50] sm:$0xff]
    %v721 = vld [vmem:[%s7 + $0x58] sm:$0xff]
    %v722 = vld [vmem:[%s7 + $0x60] sm:$0xff]
    %v723 = vld [vmem:[%s7 + $0x68] sm:$0xff]
    %v724 = vld [vmem:[%s7 + $0x70] sm:$0xff]
    %v725 = vld [vmem:[%s7 + $0x78] sm:$0xff]
    %v726 = vmul.f32 %v453, 1.442695
    %v727 = vpow.pop %v726
    %v728 = vmul.f32 %v455, 1.442695
    %v729 = vpow.pop %v728
    %v730 = vmul.f32 %v458, 1.442695
    %v731 = vpow.pop %v730
    %v732 = vmul.f32 %v460, 1.442695
    %v733 = vpow.pop %v732
    %v734 = vmul.f32 %v463, 1.442695
    %v735 = vpow.pop %v734
    %v736 = vmul.f32 %v465, 1.442695
    %v737 = vpow.pop %v736
    %v738 = vmul.f32 %v468, 1.442695
    %v739 = vpow.pop %v738
    %v740 = vmul.f32 %v470, 1.442695
    %v741 = vpow.pop %v740
    %v742 = vmul.f32 %v473, 1.442695
    %v743 = vpow.pop %v742
    %v744 = vmul.f32 %v475, 1.442695
    %v745 = vpow.pop %v744
    %v746 = vmul.f32 %v478, 1.442695
    %v747 = vpow.pop %v746
    %v748 = vmul.f32 %v480, 1.442695
    %v749 = vpow.pop %v748
    %v750 = vmul.f32 %v483, 1.442695
    %v751 = vpow.pop %v750
    %v752 = vmul.f32 %v485, 1.442695
    %v753 = vpow.pop %v752
    %v754 = vmul.f32 %v488, 1.442695
    %v755 = vpow.pop %v754
    %v756 = vmul.f32 %v490, 1.442695
    %v757 = vpow.pop %v756
    %774 = vrot.lane.b32.xlu0 %v727, 112
    %v775 = vpop.permute.xlu0 %774
    %776 = vrot.lane.b32.xlu0 %v729, 112
    %v777 = vpop.permute.xlu0 %776
    %778 = vrot.lane.b32.xlu0 %v731, 112
    %v779 = vpop.permute.xlu0 %778
    %780 = vrot.lane.b32.xlu0 %v733, 112
    %v781 = vpop.permute.xlu0 %780
    %782 = vrot.lane.b32.xlu0 %v735, 112
    %v783 = vpop.permute.xlu0 %782
    %784 = vrot.lane.b32.xlu0 %v737, 112
    %v785 = vpop.permute.xlu0 %784
    %786 = vrot.lane.b32.xlu0 %v739, 112
    %v787 = vpop.permute.xlu0 %786
    %788 = vrot.lane.b32.xlu0 %v741, 112
    %v789 = vpop.permute.xlu0 %788
    %790 = vrot.lane.b32.xlu0 %v743, 112
    %v791 = vpop.permute.xlu0 %790
    %792 = vrot.lane.b32.xlu0 %v745, 112
    %v793 = vpop.permute.xlu0 %792
    %794 = vrot.lane.b32.xlu0 %v747, 112
    %v795 = vpop.permute.xlu0 %794
    %796 = vrot.lane.b32.xlu0 %v749, 112
    %v797 = vpop.permute.xlu0 %796
    %798 = vrot.lane.b32.xlu0 %v751, 112
    %v799 = vpop.permute.xlu0 %798
    %800 = vrot.lane.b32.xlu0 %v753, 112
    %v801 = vpop.permute.xlu0 %800
    %802 = vrot.lane.b32.xlu0 %v755, 112
    %v803 = vpop.permute.xlu0 %802
    %804 = vrot.lane.b32.xlu0 %v757, 112
    %v805 = vpop.permute.xlu0 %804
    %v822 = vmul.f32 %v710, %v775
    %v823 = vmul.f32 %v711, %v777
    %v824 = vmul.f32 %v712, %v779
    %v825 = vmul.f32 %v713, %v781
    %v826 = vmul.f32 %v714, %v783
    %v827 = vmul.f32 %v715, %v785
    %v828 = vmul.f32 %v716, %v787
    %v829 = vmul.f32 %v717, %v789
    %v830 = vmul.f32 %v718, %v791
    %v831 = vmul.f32 %v719, %v793
    %v832 = vmul.f32 %v720, %v795
    %v833 = vmul.f32 %v721, %v797
    %v834 = vmul.f32 %v722, %v799
    %v835 = vmul.f32 %v723, %v801
    %v836 = vmul.f32 %v724, %v803
    %v837 = vmul.f32 %v725, %v805
    %v838 = vadd.f32 %v822, %v453
    %v839 = vadd.f32 %v823, %v455
    %v840 = vadd.f32 %v824, %v458
    %v841 = vadd.f32 %v825, %v460
    %v842 = vadd.f32 %v826, %v463
    %v843 = vadd.f32 %v827, %v465
    %v844 = vadd.f32 %v828, %v468
    %v845 = vadd.f32 %v829, %v470
    %v846 = vadd.f32 %v830, %v473
    %v847 = vadd.f32 %v831, %v475
    %v848 = vadd.f32 %v832, %v478
    %v849 = vadd.f32 %v833, %v480
    %v850 = vadd.f32 %v834, %v483
    %v851 = vadd.f32 %v835, %v485
    %v852 = vadd.f32 %v836, %v488
    %v853 = vadd.f32 %v837, %v490
    %v854 = vpack.c.bf16 %v839, %v838
    %v855 = vpack.c.bf16 %v841, %v840
    %v856 = vpack.c.bf16 %v843, %v842
    %v857 = vpack.c.bf16 %v845, %v844
    %v858 = vpack.c.bf16 %v847, %v846
    %v859 = vpack.c.bf16 %v849, %v848
    %v860 = vpack.c.bf16 %v851, %v850
    %v861 = vpack.c.bf16 %v853, %v852
    %v862 = vld [vmem:[%s8] sm:$0xff]
    %v863 = vld [vmem:[%s8 + $0x8] sm:$0xff]
    %v864 = vld [vmem:[%s8 + $0x10] sm:$0xff]
    %v865 = vld [vmem:[%s8 + $0x18] sm:$0xff]
    %v866 = vld [vmem:[%s8 + $0x20] sm:$0xff]
    %v867 = vld [vmem:[%s8 + $0x28] sm:$0xff]
    %v868 = vld [vmem:[%s8 + $0x30] sm:$0xff]
    %v869 = vld [vmem:[%s8 + $0x38] sm:$0xff]
    %v870 = vmul.f32 %v667, 1.442695
    %v871 = vpow.pop %v870
    %v872 = vmul.f32 %v669, 1.442695
    %v873 = vpow.pop %v872
    %v874 = vmul.f32 %v672, 1.442695
    %v875 = vpow.pop %v874
    %v876 = vmul.f32 %v674, 1.442695
    %v877 = vpow.pop %v876
    %v878 = vmul.f32 %v677, 1.442695
    %v879 = vpow.pop %v878
    %v880 = vmul.f32 %v679, 1.442695
    %v881 = vpow.pop %v880
    %v882 = vmul.f32 %v682, 1.442695
    %v883 = vpow.pop %v882
    %v884 = vmul.f32 %v684, 1.442695
    %v885 = vpow.pop %v884
    %894 = vrot.lane.b32.xlu0 %v871, 112
    %v895 = vpop.permute.xlu0 %894
    %896 = vrot.lane.b32.xlu0 %v873, 112
    %v897 = vpop.permute.xlu0 %896
    %898 = vrot.lane.b32.xlu0 %v875, 112
    %v899 = vpop.permute.xlu0 %898
    %900 = vrot.lane.b32.xlu0 %v877, 112
    %v901 = vpop.permute.xlu0 %900
    %902 = vrot.lane.b32.xlu0 %v879, 112
    %v903 = vpop.permute.xlu0 %902
    %904 = vrot.lane.b32.xlu0 %v881, 112
    %v905 = vpop.permute.xlu0 %904
    %906 = vrot.lane.b32.xlu0 %v883, 112
    %v907 = vpop.permute.xlu0 %906
    %908 = vrot.lane.b32.xlu0 %v885, 112
    %v909 = vpop.permute.xlu0 %908
    %v918 = vmul.f32 %v862, %v895
    %v919 = vmul.f32 %v863, %v897
    %v920 = vmul.f32 %v864, %v899
    %v921 = vmul.f32 %v865, %v901
    %v922 = vmul.f32 %v866, %v903
    %v923 = vmul.f32 %v867, %v905
    %v924 = vmul.f32 %v868, %v907
    %v925 = vmul.f32 %v869, %v909
    %v926 = vadd.f32 %v918, %v667
    %v927 = vadd.f32 %v919, %v669
    %v928 = vadd.f32 %v920, %v672
    %v929 = vadd.f32 %v921, %v674
    %v930 = vadd.f32 %v922, %v677
    %v931 = vadd.f32 %v923, %v679
    %v932 = vadd.f32 %v924, %v682
    %v933 = vadd.f32 %v925, %v684
    %v934 = vpack.c.bf16 %v927, %v926
    %v935 = vpack.c.bf16 %v929, %v928
    %v936 = vpack.c.bf16 %v931, %v930
    %v937 = vpack.c.bf16 %v933, %v932
    %vm938 = vcmask 130048
    %v940 = vsel %vm938, %v854, 0
    %v943 = vsel %vm938, %v855, 0
    %v946 = vsel %vm938, %v856, 0
    %v949 = vsel %vm938, %v857, 0
    %v952 = vsel %vm938, %v858, 0
    %v955 = vsel %vm938, %v859, 0
    %v958 = vsel %vm938, %v860, 0
    %v961 = vsel %vm938, %v861, 0
    %963 = vmatpush.bf16.xpose.msra.mxu0 %v961
    %964 = vmatpush.bf16.xpose.msra.mxu0 %v958
    %965 = vmatpush.bf16.xpose.msra.mxu0 %v955
    %966 = vmatpush.bf16.xpose.msra.mxu0 %v952
    %967 = vmatpush.bf16.xpose.msra.mxu0 %v949
    %968 = vmatpush.bf16.xpose.msra.mxu0 %v946
    %969 = vmatpush.bf16.xpose.msra.mxu0 %v943
    %970 = vmatpush.bf16.xpose.msra.mxu0 %v940
    %971 = vmatmul.bf16.gmra.mxu0 %v940
    %v972 = vpop.f32.mrf.mxu0
    %v973 = vadd.f32 0.0, %v972
    %v974 = vpop.f32.mrf.mxu0
    %v975 = vadd.f32 0.0, %v974
    %976 = vmatmul.bf16.gmra.mxu0 %v943
    %v977 = vpop.f32.mrf.mxu0
    %v978 = vadd.f32 0.0, %v977
    %v979 = vpop.f32.mrf.mxu0
    %v980 = vadd.f32 0.0, %v979
    %981 = vmatmul.bf16.gmra.mxu0 %v946
    %v982 = vpop.f32.mrf.mxu0
    %v983 = vadd.f32 0.0, %v982
    %v984 = vpop.f32.mrf.mxu0
    %v985 = vadd.f32 0.0, %v984
    %986 = vmatmul.bf16.gmra.mxu0 %v949
    %v987 = vpop.f32.mrf.mxu0
    %v988 = vadd.f32 0.0, %v987
    %v989 = vpop.f32.mrf.mxu0
    %v990 = vadd.f32 0.0, %v989
    %991 = vmatmul.bf16.gmra.mxu0 %v952
    %v992 = vpop.f32.mrf.mxu0
    %v993 = vadd.f32 0.0, %v992
    %v994 = vpop.f32.mrf.mxu0
    %v995 = vadd.f32 0.0, %v994
    %996 = vmatmul.bf16.gmra.mxu0 %v955
    %v997 = vpop.f32.mrf.mxu0
    %v998 = vadd.f32 0.0, %v997
    %v999 = vpop.f32.mrf.mxu0
    %v1000 = vadd.f32 0.0, %v999
    %1001 = vmatmul.bf16.gmra.mxu0 %v958
    %v1002 = vpop.f32.mrf.mxu0
    %v1003 = vadd.f32 0.0, %v1002
    %v1004 = vpop.f32.mrf.mxu0
    %v1005 = vadd.f32 0.0, %v1004
    %1006 = vmatmul.bf16.gmra.mxu0 %v961
    %v1007 = vpop.f32.mrf.mxu0
    %v1008 = vadd.f32 0.0, %v1007
    %v1009 = vpop.f32.mrf.mxu0
    %v1010 = vadd.f32 0.0, %v1009
    %1011 = vdwg.mxu0
    %v1012 = vpack.c.bf16 %v973, %v973
    %v1013 = vpack.c.bf16 %v975, %v975
    %v1014 = vpack.c.bf16 %v978, %v978
    %v1015 = vpack.c.bf16 %v980, %v980
    %v1016 = vpack.c.bf16 %v983, %v983
    %v1017 = vpack.c.bf16 %v985, %v985
    %v1018 = vpack.c.bf16 %v988, %v988
    %v1019 = vpack.c.bf16 %v990, %v990
    %v1020 = vpack.c.bf16 %v993, %v993
    %v1021 = vpack.c.bf16 %v995, %v995
    %v1022 = vpack.c.bf16 %v998, %v998
    %v1023 = vpack.c.bf16 %v1000, %v1000
    %v1024 = vpack.c.bf16 %v1003, %v1003
    %v1025 = vpack.c.bf16 %v1005, %v1005
    %v1026 = vpack.c.bf16 %v1008, %v1008
    %v1027 = vpack.c.bf16 %v1010, %v1010
    %1028 = vst [vmem:[#allocation2] sm:$0xf] %v1012
    %1029 = vst [vmem:[#allocation2 + $0x4] sm:$0xf] %v1013
    %1030 = vst [vmem:[#allocation2 + $0x8] sm:$0xf] %v1014
    %1031 = vst [vmem:[#allocation2 + $0xc] sm:$0xf] %v1015
    %1032 = vst [vmem:[#allocation2 + $0x10] sm:$0xf] %v1016
    %1033 = vst [vmem:[#allocation2 + $0x14] sm:$0xf] %v1017
    %1034 = vst [vmem:[#allocation2 + $0x18] sm:$0xf] %v1018
    %1035 = vst [vmem:[#allocation2 + $0x1c] sm:$0xf] %v1019
    %1036 = vst [vmem:[#allocation2 + $0x20] sm:$0xf] %v1020
    %1037 = vst [vmem:[#allocation2 + $0x24] sm:$0xf] %v1021
    %1038 = vst [vmem:[#allocation2 + $0x28] sm:$0xf] %v1022
    %1039 = vst [vmem:[#allocation2 + $0x2c] sm:$0xf] %v1023
    %1040 = vst [vmem:[#allocation2 + $0x30] sm:$0xf] %v1024
    %1041 = vst [vmem:[#allocation2 + $0x34] sm:$0xf] %v1025
    %1042 = vst [vmem:[#allocation2 + $0x38] sm:$0xf] %v1026
    %1043 = vst [vmem:[#allocation2 + $0x3c] sm:$0xf] %v1027
    %v1045 = vsel %vm938, %v934, 0
    %v1048 = vsel %vm938, %v935, 0
    %v1051 = vsel %vm938, %v936, 0
    %v1054 = vsel %vm938, %v937, 0
    %1056 = vmatpush.bf16.xpose.msra.mxu0 0
    %1057 = vmatpush.bf16.xpose.msra.mxu0 0
    %1058 = vmatpush.bf16.xpose.msra.mxu0 0
    %1059 = vmatpush.bf16.xpose.msra.mxu0 0
    %1060 = vmatpush.bf16.xpose.msra.mxu0 %v1054
    %1061 = vmatpush.bf16.xpose.msra.mxu0 %v1051
    %1062 = vmatpush.bf16.xpose.msra.mxu0 %v1048
    %1063 = vmatpush.bf16.xpose.msra.mxu0 %v1045
    %1064 = vmatmul.bf16.gmra.mxu0 %v940
    %v1065 = vpop.f32.mrf.mxu0
    %v1066 = vadd.f32 0.0, %v1065
    %v1067 = vpop.f32.mrf.mxu0
    %v1068 = vadd.f32 0.0, %v1067
    %1069 = vmatmul.bf16.gmra.mxu0 %v943
    %v1070 = vpop.f32.mrf.mxu0
    %v1071 = vadd.f32 0.0, %v1070
    %v1072 = vpop.f32.mrf.mxu0
    %v1073 = vadd.f32 0.0, %v1072
    %1074 = vmatmul.bf16.gmra.mxu0 %v946
    %v1075 = vpop.f32.mrf.mxu0
    %v1076 = vadd.f32 0.0, %v1075
    %v1077 = vpop.f32.mrf.mxu0
    %v1078 = vadd.f32 0.0, %v1077
    %1079 = vmatmul.bf16.gmra.mxu0 %v949
    %v1080 = vpop.f32.mrf.mxu0
    %v1081 = vadd.f32 0.0, %v1080
    %v1082 = vpop.f32.mrf.mxu0
    %v1083 = vadd.f32 0.0, %v1082
    %1084 = vmatmul.bf16.gmra.mxu0 %v952
    %v1085 = vpop.f32.mrf.mxu0
    %v1086 = vadd.f32 0.0, %v1085
    %v1087 = vpop.f32.mrf.mxu0
    %v1088 = vadd.f32 0.0, %v1087
    %1089 = vmatmul.bf16.gmra.mxu0 %v955
    %v1090 = vpop.f32.mrf.mxu0
    %v1091 = vadd.f32 0.0, %v1090
    %v1092 = vpop.f32.mrf.mxu0
    %v1093 = vadd.f32 0.0, %v1092
    %1094 = vmatmul.bf16.gmra.mxu0 %v958
    %v1095 = vpop.f32.mrf.mxu0
    %v1096 = vadd.f32 0.0, %v1095
    %v1097 = vpop.f32.mrf.mxu0
    %v1098 = vadd.f32 0.0, %v1097
    %1099 = vmatmul.bf16.gmra.mxu0 %v961
    %v1100 = vpop.f32.mrf.mxu0
    %v1101 = vadd.f32 0.0, %v1100
    %v1102 = vpop.f32.mrf.mxu0
    %v1103 = vadd.f32 0.0, %v1102
    %1104 = vdwg.mxu0
    %v1105 = vpack.c.bf16 %v1066, %v1066
    %v1106 = vpack.c.bf16 %v1068, %v1068
    %v1107 = vpack.c.bf16 %v1071, %v1071
    %v1108 = vpack.c.bf16 %v1073, %v1073
    %v1109 = vpack.c.bf16 %v1076, %v1076
    %v1110 = vpack.c.bf16 %v1078, %v1078
    %v1111 = vpack.c.bf16 %v1081, %v1081
    %v1112 = vpack.c.bf16 %v1083, %v1083
    %v1113 = vpack.c.bf16 %v1086, %v1086
    %v1114 = vpack.c.bf16 %v1088, %v1088
    %v1115 = vpack.c.bf16 %v1091, %v1091
    %v1116 = vpack.c.bf16 %v1093, %v1093
    %v1117 = vpack.c.bf16 %v1096, %v1096
    %v1118 = vpack.c.bf16 %v1098, %v1098
    %v1119 = vpack.c.bf16 %v1101, %v1101
    %v1120 = vpack.c.bf16 %v1103, %v1103
    %vm1121 = vcmask 519168
    %1122 = vst.msk [vmem:[%s12] sm:$0xf] %vm1121, %v1105
    %1123 = vst.msk [vmem:[%s12 + $0x4] sm:$0xf] %vm1121, %v1106
    %1124 = vst.msk [vmem:[%s12 + $0x8] sm:$0xf] %vm1121, %v1107
    %1125 = vst.msk [vmem:[%s12 + $0xc] sm:$0xf] %vm1121, %v1108
    %1126 = vst.msk [vmem:[%s12 + $0x10] sm:$0xf] %vm1121, %v1109
    %1127 = vst.msk [vmem:[%s12 + $0x14] sm:$0xf] %vm1121, %v1110
    %1128 = vst.msk [vmem:[%s12 + $0x18] sm:$0xf] %vm1121, %v1111
    %1129 = vst.msk [vmem:[%s12 + $0x1c] sm:$0xf] %vm1121, %v1112
    %1130 = vst.msk [vmem:[%s12 + $0x20] sm:$0xf] %vm1121, %v1113
    %1131 = vst.msk [vmem:[%s12 + $0x24] sm:$0xf] %vm1121, %v1114
    %1132 = vst.msk [vmem:[%s12 + $0x28] sm:$0xf] %vm1121, %v1115
    %1133 = vst.msk [vmem:[%s12 + $0x2c] sm:$0xf] %vm1121, %v1116
    %1134 = vst.msk [vmem:[%s12 + $0x30] sm:$0xf] %vm1121, %v1117
    %1135 = vst.msk [vmem:[%s12 + $0x34] sm:$0xf] %vm1121, %v1118
    %1136 = vst.msk [vmem:[%s12 + $0x38] sm:$0xf] %vm1121, %v1119
    %1137 = vst.msk [vmem:[%s12 + $0x3c] sm:$0xf] %vm1121, %v1120
    // Predicated region
    $region38: #{tpu_custom_call.1} parent=1 // pred_check
      _
    $region39: #{tpu_custom_call.1} parent=1 // pred_check_branch
      %1139 = sbr.rel (0) target = $region41
    $region40: #{tpu_custom_call.1} parent=1 // pred_region
      _
    $region41: #{tpu_custom_call.1} parent=1 // pred_fallthru
      _
    // Predicated region
    $region42: #{tpu_custom_call.1} parent=1 // pred_check
      _
    $region43: #{tpu_custom_call.1} parent=1 // pred_check_branch
      %1141 = sbr.rel (0) target = $region45
    $region44: #{tpu_custom_call.1} parent=1 // pred_region
      _
    $region45: #{tpu_custom_call.1} parent=1 // pred_fallthru
      _
    // Predicated region
    $region46: #{tpu_custom_call.1} parent=1 // pred_check
      _
    $region47: #{tpu_custom_call.1} parent=1 // pred_check_branch
      %1143 = sbr.rel (0) target = $region49
    $region48: #{tpu_custom_call.1} parent=1 // pred_region
      %1145 = vsyncadd [#allocation3], 0
      %s1146 = sshll.u32 [#allocation2], 4
      %s1147 = int_to_ptr.vmem [resolvable:$true] %s1146
      %s1148 = sshll.u32 %s11, 4
      %s1149 = int_to_ptr.hbm [resolvable:$true] %s1148
      %1154 = dma.vmem_to_hbm [thread:$0]  %s1147, 1024, %s1149, [#allocation3], 64, 64, 4
    $region49: #{tpu_custom_call.1} parent=1 // pred_fallthru
      _
    // Predicated region
    $region50: #{tpu_custom_call.1} parent=1 // pred_check
      _
    $region51: #{tpu_custom_call.1} parent=1 // pred_check_branch
      %1156 = sbr.rel (0) target = $region53
    $region52: #{tpu_custom_call.1} parent=1 // pred_region
      _
    $region53: #{tpu_custom_call.1} parent=1 // pred_fallthru
      _
    // Predicated region
    $region54: #{tpu_custom_call.1} parent=1 // pred_check
      _
    $region55: #{tpu_custom_call.1} parent=1 // pred_check_branch
      %1158 = sbr.rel (0) target = $region57
    $region56: #{tpu_custom_call.1} parent=1 // pred_region
      _
    $region57: #{tpu_custom_call.1} parent=1 // pred_fallthru
      _
    // Predicated region
    $region58: #{tpu_custom_call.1} parent=1 // pred_check
      _
    $region59: #{tpu_custom_call.1} parent=1 // pred_check_branch
      %1160 = sbr.rel (0) target = $region61
    $region60: #{tpu_custom_call.1} parent=1 // pred_region
      _
    $region61: #{tpu_custom_call.1} parent=1 // pred_fallthru
      _
    // Predicated region
    $region62: #{tpu_custom_call.1} parent=1 // pred_check
      _
    $region63: #{tpu_custom_call.1} parent=1 // pred_check_branch
      %1162 = sbr.rel (0) target = $region65
    $region64: #{tpu_custom_call.1} parent=1 // pred_region
      %1164 = dma.done [#allocation3], 1024
    $region65: #{tpu_custom_call.1} parent=1 // pred_fallthru
      _
    // Predicated region
    $region66: #{tpu_custom_call.1} parent=1 // pred_check
      _
    $region67: #{tpu_custom_call.1} parent=1 // pred_check_branch
      %1166 = sbr.rel (0) target = $region69
    $region68: #{tpu_custom_call.1} parent=1 // pred_region
      _
    $region69: #{tpu_custom_call.1} parent=1 // pred_fallthru
      _
    %1167 = vsyncpa [#allocation3], 1

</llo_original>
